<compile_context>
chip_gen: v7x
topology: tpu7x:2x2x1
jax: 0.10.0
libtpu: 0.0.40
codegen_flags: <defaults>
</compile_context>

<pallas_src>
import jax
import jax.numpy as jnp
from jax.experimental import pallas as pl
from jax.experimental.pallas import tpu as pltpu

THRESH = 1.0   # BatchNorm3d1.reset_parameters: weight = thresh, bias = 0
EPS = 1e-5

_TARGET_BLOCK_BYTES = 2 * 1024 * 1024     # ~2 MiB per input block
_MAX_LANE_ACC_BYTES = 4 * 1024 * 1024     # cap on the two lane-dense accumulators


def _stats_kernel_lane_acc(x_ref, sum_ref, sq_ref, acc_sum, acc_sq):
    """Per-channel sum / sum-of-squares; lane-dense (C, HW) accumulators.

    Per-step work is a pure-VPU reduction over the block-major axis; the
    expensive cross-lane reduction runs once, in the last-step epilogue.
    """
    j = pl.program_id(1)

    @pl.when(j == 0)
    def _():
        acc_sum[...] = jnp.zeros_like(acc_sum)
        acc_sq[...] = jnp.zeros_like(acc_sq)

    x = x_ref[...].astype(jnp.float32)            # (tile_b, C, HW)
    acc_sum[...] += jnp.sum(x, axis=0)            # VPU adds -> (C, HW)
    acc_sq[...] += jnp.sum(x * x, axis=0)

    @pl.when(j == pl.num_programs(1) - 1)
    def _():
        # One cross-lane (XLU) reduction per partition.
        sum_ref[...] = jnp.sum(acc_sum[...], axis=-1, keepdims=True)[None, :, :]
        sq_ref[...] = jnp.sum(acc_sq[...], axis=-1, keepdims=True)[None, :, :]


def _stats_kernel_eager(x_ref, sum_ref, sq_ref, acc_sum, acc_sq):
    """Fallback for large C*HW: eager per-step cross-lane reduce, (C, 1) scratch."""
    j = pl.program_id(1)

    @pl.when(j == 0)
    def _():
        acc_sum[...] = jnp.zeros_like(acc_sum)
        acc_sq[...] = jnp.zeros_like(acc_sq)

    x = x_ref[...].astype(jnp.float32)            # (tile_b, C, HW)
    acc_sum[...] += jnp.sum(x, axis=0).sum(axis=-1, keepdims=True)        # (C, 1)
    acc_sq[...] += jnp.sum(x * x, axis=0).sum(axis=-1, keepdims=True)

    @pl.when(j == pl.num_programs(1) - 1)
    def _():
        sum_ref[...] = acc_sum[...][None, :, :]
        sq_ref[...] = acc_sq[...][None, :, :]


def _normalize_kernel(x_ref, scale_ref, shift_ref, o_ref):
    """y = x * scale[c] + shift[c]  (scale/shift fold mean, invstd, gamma, beta)."""
    x = x_ref[...].astype(jnp.float32)            # (tile_b, C, HW)
    o_ref[...] = (x * scale_ref[...] + shift_ref[...]).astype(o_ref.dtype)


def batch_norm_2d_forward(x, weight, bias, eps=EPS,
                          target_block_bytes=_TARGET_BLOCK_BYTES,
                          max_lane_acc_bytes=_MAX_LANE_ACC_BYTES):
    """Training-mode batch norm over the channel dim of a (T, N, C, H, W) tensor."""
    T, N, C, H, W = x.shape
    B, HW = T * N, H * W

    # Free, contiguous reshape: channels stay on the sublane axis, HW on lanes.
    xs = x.reshape(B, C, HW)

    # Tile over B only; largest divisor of B whose block is <= target bytes.
    bytes_per_b = C * HW * x.dtype.itemsize
    cap = max(1, target_block_bytes // max(bytes_per_b, 1))
    tile_b = max(d for d in range(1, B + 1) if B % d == 0 and d <= cap)
    n_tiles = B // tile_b

    # Leading "parallel" partition axis so both v7x TensorCores share the
    # reduction pass (single partition when there is nothing to split).
    n_parts = 2 if (n_tiles >= 2 and n_tiles % 2 == 0) else 1
    tiles_per_part = n_tiles // n_parts

    # Pick stats variant by accumulator footprint (2 f32 accumulators).
    use_lane_acc = (2 * C * HW * 4) <= max_lane_acc_bytes
    stats_kernel = _stats_kernel_lane_acc if use_lane_acc else _stats_kernel_eager
    acc_shape = (C, HW) if use_lane_acc else (C, 1)

    # ---- pass 1: per-channel partial sums / sums of squares -----------------
    part_sums, part_sqs = pl.pallas_call(
        stats_kernel,
        out_shape=(
            jax.ShapeDtypeStruct((n_parts, C, 1), jnp.float32),
            jax.ShapeDtypeStruct((n_parts, C, 1), jnp.float32),
        ),
        grid=(n_parts, tiles_per_part),
        in_specs=[
            pl.BlockSpec((tile_b, C, HW),
                         lambda p, j: (p * tiles_per_part + j, 0, 0)),
        ],
        out_specs=(
            pl.BlockSpec((1, C, 1), lambda p, j: (p, 0, 0)),
            pl.BlockSpec((1, C, 1), lambda p, j: (p, 0, 0)),
        ),
        scratch_shapes=[
            pltpu.VMEM(acc_shape, jnp.float32),
            pltpu.VMEM(acc_shape, jnp.float32),
        ],
        compiler_params=pltpu.CompilerParams(
            dimension_semantics=("parallel", "arbitrary")),
    )(xs)

    # ---- tiny per-channel scalar math in plain JAX --------------------------
    sums = jnp.sum(part_sums, axis=0)[:, 0]       # (C,)
    sqs = jnp.sum(part_sqs, axis=0)[:, 0]         # (C,)
    count = jnp.float32(B * HW)                   # = T*N*H*W
    mean = sums / count
    # Biased variance (PyTorch training-mode BN).  Clamp guards the small
    # negative values E[x^2] - mean^2 can produce from f32 cancellation.
    var = jnp.maximum(sqs / count - mean * mean, 0.0)
    invstd = jax.lax.rsqrt(var + eps)
    scale = weight.astype(jnp.float32) * invstd
    shift = bias.astype(jnp.float32) - mean * scale
    scale3 = scale.reshape(1, C, 1)
    shift3 = shift.reshape(1, C, 1)
    # TODO(synk): running_mean/running_var (momentum) buffer updates are a
    # training side-effect of nn.BatchNorm3d and are not materialized here.

    # ---- pass 2: elementwise normalization -----------------------------------
    out = pl.pallas_call(
        _normalize_kernel,
        out_shape=jax.ShapeDtypeStruct((B, C, HW), x.dtype),
        grid=(n_tiles,),
        in_specs=[
            pl.BlockSpec((tile_b, C, HW), lambda j: (j, 0, 0)),
            pl.BlockSpec((1, C, 1), lambda j: (0, 0, 0)),
            pl.BlockSpec((1, C, 1), lambda j: (0, 0, 0)),
        ],
        out_specs=pl.BlockSpec((tile_b, C, HW), lambda j: (j, 0, 0)),
        compiler_params=pltpu.CompilerParams(dimension_semantics=("parallel",)),
    )(xs, scale3, shift3)

    # Free contiguous reshape back to the original layout (no transpose needed).
    return out.reshape(T, N, C, H, W)


def _reference(x, weight, bias, eps=EPS):
    """Pure-JAX reference matching PyTorch training-mode BatchNorm semantics."""
    xf = x.astype(jnp.float32)
    mean = jnp.mean(xf, axis=(0, 1, 3, 4), keepdims=True)
    var = jnp.mean((xf - mean) ** 2, axis=(0, 1, 3, 4), keepdims=True)
    w = weight.reshape(1, 1, -1, 1, 1)
    b = bias.reshape(1, 1, -1, 1, 1)
    return ((xf - mean) * jax.lax.rsqrt(var + eps) * w + b).astype(x.dtype)


if __name__ == "__main__":
    key = jax.random.PRNGKey(0)
    T, N, C, H, W = 4, 2, 4, 8, 8          # (time, batch, channels, H, W)
    x = jax.random.normal(key, (T, N, C, H, W), dtype=jnp.float32)

    # Deterministic parameters per BatchNorm3d1.reset_parameters.
    weight = jnp.full((C,), THRESH, dtype=jnp.float32)
    bias = jnp.zeros((C,), dtype=jnp.float32)

    y_ref = _reference(x, weight, bias)

    # Default path: single tile, lane-dense accumulators.
    y = jax.block_until_ready(batch_norm_2d_forward(x, weight, bias))
    assert y.shape == x.shape and y.dtype == x.dtype
    assert jnp.allclose(y, y_ref, atol=1e-4, rtol=1e-4), "mismatch vs reference"

    # Also exercise the multi-tile / 2-partition reduction path and the
    # scratch-capped eager-reduce stats variant with tiny limits.
    y2 = jax.block_until_ready(
        batch_norm_2d_forward(x, weight, bias,
                              target_block_bytes=C * H * W * 4,  # tile_b = 1
                              max_lane_acc_bytes=0))             # eager stats
    assert jnp.allclose(y2, y_ref, atol=1e-4, rtol=1e-4), "mismatch (tiled path)"

    print("KERNEL_OK")
</pallas_src>

<mosaic_0001>
module attributes {stable_mosaic.version = 11 : i64} {
  func.func @_stats_kernel_lane_acc(%arg0: i32, %arg1: i32, %arg2: memref<8x4x64xf32, #tpu.memory_space<vmem>>, %arg3: memref<1x4x1xf32, #tpu.memory_space<vmem>>, %arg4: memref<1x4x1xf32, #tpu.memory_space<vmem>>, %arg5: memref<4x64xf32, #tpu.memory_space<vmem>>, %arg6: memref<4x64xf32, #tpu.memory_space<vmem>>) attributes {dimension_semantics = [#tpu.dimension_semantics<parallel>, #tpu.dimension_semantics<arbitrary>], iteration_bounds = array<i64: 1, 1>, scalar_prefetch = 0 : i64, scratch_operands = 2 : i64, tpu.core_type = #tpu.core_type<tc>, window_params = [{transform_indices = @transform_0, window_bounds = array<i64: 8, 4, 64>}, {transform_indices = @transform_1, window_bounds = array<i64: 1, 4, 1>}, {transform_indices = @transform_2, window_bounds = array<i64: 1, 4, 1>}]} {
    %c0_i32 = arith.constant 0 : i32
    %0 = arith.cmpi eq, %arg1, %c0_i32 : i32
    %1 = arith.extui %0 : i1 to i32
    %c0_i32_0 = arith.constant 0 : i32
    %2 = arith.cmpi ne, %1, %c0_i32_0 : i32
    scf.if %2 {
      %cst_14 = arith.constant 0.000000e+00 : f32
      %16 = vector.broadcast %cst_14 : f32 to vector<4x64xf32>
      %c0_15 = arith.constant 0 : index
      %c0_16 = arith.constant 0 : index
      %17 = vector.load %arg5[%c0_15, %c0_16] : memref<4x64xf32, #tpu.memory_space<vmem>>, vector<4x64xf32>
      tpu.vector_store %arg5[%c0_15, %c0_16], %16 {strides = array<i32>} : memref<4x64xf32, #tpu.memory_space<vmem>>, vector<4x64xf32>,
      %cst_17 = arith.constant 0.000000e+00 : f32
      %18 = vector.broadcast %cst_17 : f32 to vector<4x64xf32>
      %c0_18 = arith.constant 0 : index
      %c0_19 = arith.constant 0 : index
      %19 = vector.load %arg6[%c0_18, %c0_19] : memref<4x64xf32, #tpu.memory_space<vmem>>, vector<4x64xf32>
      tpu.vector_store %arg6[%c0_18, %c0_19], %18 {strides = array<i32>} : memref<4x64xf32, #tpu.memory_space<vmem>>, vector<4x64xf32>,
    } else {
    }
    %c0 = arith.constant 0 : index
    %c0_1 = arith.constant 0 : index
    %c0_2 = arith.constant 0 : index
    %3 = vector.load %arg2[%c0, %c0_1, %c0_2] : memref<8x4x64xf32, #tpu.memory_space<vmem>>, vector<8x4x64xf32>
    %c0_3 = arith.constant 0 : index
    %c0_4 = arith.constant 0 : index
    %4 = vector.load %arg5[%c0_3, %c0_4] : memref<4x64xf32, #tpu.memory_space<vmem>>, vector<4x64xf32>
    %cst = arith.constant dense<0.000000e+00> : vector<4x64xf32>
    %5 = vector.multi_reduction <add>, %3, %cst [0] : vector<8x4x64xf32> to vector<4x64xf32>
    %6 = arith.addf %4, %5 : vector<4x64xf32>
    %c0_5 = arith.constant 0 : index
    %c0_6 = arith.constant 0 : index
    %7 = vector.load %arg5[%c0_5, %c0_6] : memref<4x64xf32, #tpu.memory_space<vmem>>, vector<4x64xf32>
    tpu.vector_store %arg5[%c0_5, %c0_6], %6 {strides = array<i32>} : memref<4x64xf32, #tpu.memory_space<vmem>>, vector<4x64xf32>,
    %c0_7 = arith.constant 0 : index
    %c0_8 = arith.constant 0 : index
    %8 = vector.load %arg6[%c0_7, %c0_8] : memref<4x64xf32, #tpu.memory_space<vmem>>, vector<4x64xf32>
    %9 = arith.mulf %3, %3 : vector<8x4x64xf32>
    %cst_9 = arith.constant dense<0.000000e+00> : vector<4x64xf32>
    %10 = vector.multi_reduction <add>, %9, %cst_9 [0] : vector<8x4x64xf32> to vector<4x64xf32>
    %11 = arith.addf %8, %10 : vector<4x64xf32>
    %c0_10 = arith.constant 0 : index
    %c0_11 = arith.constant 0 : index
    %12 = vector.load %arg6[%c0_10, %c0_11] : memref<4x64xf32, #tpu.memory_space<vmem>>, vector<4x64xf32>
    tpu.vector_store %arg6[%c0_10, %c0_11], %11 {strides = array<i32>} : memref<4x64xf32, #tpu.memory_space<vmem>>, vector<4x64xf32>,
    %c0_i32_12 = arith.constant 0 : i32
    %13 = arith.cmpi eq, %arg1, %c0_i32_12 : i32
    %14 = arith.extui %13 : i1 to i32
    %c0_i32_13 = arith.constant 0 : i32
    %15 = arith.cmpi ne, %14, %c0_i32_13 : i32
    scf.if %15 {
      %c0_14 = arith.constant 0 : index
      %c0_15 = arith.constant 0 : index
      %16 = vector.load %arg5[%c0_14, %c0_15] : memref<4x64xf32, #tpu.memory_space<vmem>>, vector<4x64xf32>
      %cst_16 = arith.constant dense<0.000000e+00> : vector<4xf32>
      %17 = vector.multi_reduction <add>, %16, %cst_16 [1] : vector<4x64xf32> to vector<4xf32>
      %18 = vector.shape_cast %17 : vector<4xf32> to vector<4x1xf32>
      %19 = vector.shape_cast %18 : vector<4x1xf32> to vector<1x4x1xf32>
      %c0_17 = arith.constant 0 : index
      %c0_18 = arith.constant 0 : index
      %c0_19 = arith.constant 0 : index
      %20 = vector.load %arg3[%c0_17, %c0_18, %c0_19] : memref<1x4x1xf32, #tpu.memory_space<vmem>>, vector<1x4x1xf32>
      tpu.vector_store %arg3[%c0_17, %c0_18, %c0_19], %19 {strides = array<i32>} : memref<1x4x1xf32, #tpu.memory_space<vmem>>, vector<1x4x1xf32>,
      %c0_20 = arith.constant 0 : index
      %c0_21 = arith.constant 0 : index
      %21 = vector.load %arg6[%c0_20, %c0_21] : memref<4x64xf32, #tpu.memory_space<vmem>>, vector<4x64xf32>
      %cst_22 = arith.constant dense<0.000000e+00> : vector<4xf32>
      %22 = vector.multi_reduction <add>, %21, %cst_22 [1] : vector<4x64xf32> to vector<4xf32>
      %23 = vector.shape_cast %22 : vector<4xf32> to vector<4x1xf32>
      %24 = vector.shape_cast %23 : vector<4x1xf32> to vector<1x4x1xf32>
      %c0_23 = arith.constant 0 : index
      %c0_24 = arith.constant 0 : index
      %c0_25 = arith.constant 0 : index
      %25 = vector.load %arg4[%c0_23, %c0_24, %c0_25] : memref<1x4x1xf32, #tpu.memory_space<vmem>>, vector<1x4x1xf32>
      tpu.vector_store %arg4[%c0_23, %c0_24, %c0_25], %24 {strides = array<i32>} : memref<1x4x1xf32, #tpu.memory_space<vmem>>, vector<1x4x1xf32>,
    } else {
    }
    return
  }
  func.func @transform_0(%arg0: i32, %arg1: i32) -> (i32, i32, i32) {
    %c1_i32 = arith.constant 1 : i32
    %0 = arith.muli %arg0, %c1_i32 : i32
    %1 = arith.addi %0, %arg1 : i32
    %c0_i32 = arith.constant 0 : i32
    %c0_i32_0 = arith.constant 0 : i32
    %c0_i32_1 = arith.constant 0 : i32
    return %1, %c0_i32, %c0_i32_0 : i32, i32, i32
  }
  func.func @transform_1(%arg0: i32, %arg1: i32) -> (i32, i32, i32) {
    %c0_i32 = arith.constant 0 : i32
    %c0_i32_0 = arith.constant 0 : i32
    %c0_i32_1 = arith.constant 0 : i32
    return %arg0, %c0_i32, %c0_i32_0 : i32, i32, i32
  }
  func.func @transform_2(%arg0: i32, %arg1: i32) -> (i32, i32, i32) {
    %c0_i32 = arith.constant 0 : i32
    %c0_i32_0 = arith.constant 0 : i32
    %c0_i32_1 = arith.constant 0 : i32
    return %arg0, %c0_i32, %c0_i32_0 : i32, i32, i32
  }
}

</mosaic_0001>

<llo_original>
// kernel: tpu_custom_call.1
$region0: #{tpu_custom_call.1}
  #allocation0 [shape = 'u32[]', space=smem, size = 0x4, offset = 0x4, fixed_abs, tag = 'smem constant byte address 0x4 - core index']
  #allocation1 [shape = 'u32[144,128]{1,0:T(1,128)}', space=vmem, size = 0x12000, scoped, tag = 'internal scratch']
  #allocation2 [shape = 'f32[4,64]{1,0:T(4,128)}', space=vmem, size = 0x800, scoped, tag = 'scratch operand']
  #allocation3 [shape = 'f32[4,64]{1,0:T(4,128)}', space=vmem, size = 0x800, scoped, tag = 'scratch operand']
  %s0 = inlined_call_operand.hbm [shape: f32[8,4,64], index: 0, kind: input, shape index: {}]
  %s1 = inlined_call_operand.vmem [shape: f32[1,4,1], index: 1, kind: output, shape index: {0}]
  %s2 = inlined_call_operand.vmem [shape: f32[1,4,1], index: 2, kind: output, shape index: {1}]
  %3 = xla_tuple %s1, %s2
  %s4 = sld [smem:[#allocation0]]
  $region34: #{tpu_custom_call.1} parent=0
    _
  %s6 = ssub.s32 1, %s4
  %s7 = scalar_select 0, %s6, %s4
  $region1: #{tpu_custom_call.1} parent=0
    #allocation4 [shape = 'u8[16384]{0}', space=vmem, size = 0x4000, scoped, tag = 'input window, operand 0, single buffered']
    #allocation5 [shape = 's32[1]{0}', space=sflag, size = 0x4, scoped, tag = 'scoped memory for tpu_custom_call.1']
    %8 = vsyncpa [#allocation5], 0
    // Predicated region
    $region2: #{tpu_custom_call.1} parent=1 // pred_check
      _
    $region3: #{tpu_custom_call.1} parent=1 // pred_check_branch
      %10 = sbr.rel (0) target = $region5
    $region4: #{tpu_custom_call.1} parent=1 // pred_region
      %s11 = sadd.s32 0, 0
      %s12 = smul.u32 8, %s11
      %s14 = ssub.s32 512, 512
      %15 = vsyncadd [#allocation5], %s14
      %s16 = smul.addr %s12, 64
      %s17 = scalar_lea.hbm %s0, %s16
      %s18 = sshll.u32 [#allocation4], 4
      %s19 = int_to_ptr.vmem [resolvable:$true] %s18
      %24 = dma.hbm_to_vmem [thread:$0]  %s17, 512, %s19, [#allocation5], 64, 64, 4
    $region5: #{tpu_custom_call.1} parent=1 // pred_fallthru
      _
    // Predicated region
    $region6: #{tpu_custom_call.1} parent=1 // pred_check
      _
    $region7: #{tpu_custom_call.1} parent=1 // pred_check_branch
      %26 = sbr.rel (0) target = $region9
    $region8: #{tpu_custom_call.1} parent=1 // pred_region
      %27 = dma.done [#allocation5], 512
    $region9: #{tpu_custom_call.1} parent=1 // pred_fallthru
      _
    %s28 = sadd.s32 0, 0
    %s29 = smul.u32 8, %s28
    %p30 = scmp.eq.s32.totalorder 0, 0
    // Predicated region
    $region10: #{tpu_custom_call.1} parent=1 // pred_check
      %p31 = pneg %p30
    $region11: #{tpu_custom_call.1} parent=1 // pred_check_branch
      %33 = sbr.rel (%p31) target = $region13
    $region12: #{tpu_custom_call.1} parent=1 // pred_region
      %vm34 = vcmask 519168
      %35 = vst.msk [vmem:[#allocation2] sm:$0xf] %vm34, 0.0
      %36 = vst.msk [vmem:[#allocation3] sm:$0xf] %vm34, 0.0
    $region13: #{tpu_custom_call.1} parent=1 // pred_fallthru
      _
    %v37 = vld [vmem:[#allocation4] sm:$0xf]
    %v38 = vld [vmem:[#allocation4 + $0x4] sm:$0xf]
    %v39 = vld [vmem:[#allocation4 + $0x8] sm:$0xf]
    %v40 = vld [vmem:[#allocation4 + $0xc] sm:$0xf]
    %v41 = vld [vmem:[#allocation4 + $0x10] sm:$0xf]
    %v42 = vld [vmem:[#allocation4 + $0x14] sm:$0xf]
    %v43 = vld [vmem:[#allocation4 + $0x18] sm:$0xf]
    %v44 = vld [vmem:[#allocation4 + $0x1c] sm:$0xf]
    %v45 = vld [vmem:[#allocation2] sm:$0xf]
    %vm46 = vcmask 519168
    %v47 = vsel %vm46, %v37, 0.0
    %v48 = vsel %vm46, %v38, 0.0
    %v49 = vadd.f32 %v47, %v48
    %v50 = vsel %vm46, %v39, 0.0
    %v51 = vadd.f32 %v49, %v50
    %v52 = vsel %vm46, %v40, 0.0
    %v53 = vadd.f32 %v51, %v52
    %v54 = vsel %vm46, %v41, 0.0
    %v55 = vadd.f32 %v53, %v54
    %v56 = vsel %vm46, %v42, 0.0
    %v57 = vadd.f32 %v55, %v56
    %v58 = vsel %vm46, %v43, 0.0
    %v59 = vadd.f32 %v57, %v58
    %v60 = vsel %vm46, %v44, 0.0
    %v61 = vadd.f32 %v59, %v60
    %v62 = vadd.f32 %v45, %v61
    %63 = vst.msk [vmem:[#allocation2] sm:$0xf] %vm46, %v62
    %v64 = vld [vmem:[#allocation3] sm:$0xf]
    %v65 = vmul.f32 %v37, %v37
    %v66 = vmul.f32 %v38, %v38
    %v67 = vmul.f32 %v39, %v39
    %v68 = vmul.f32 %v40, %v40
    %v69 = vmul.f32 %v41, %v41
    %v70 = vmul.f32 %v42, %v42
    %v71 = vmul.f32 %v43, %v43
    %v72 = vmul.f32 %v44, %v44
    %v73 = vsel %vm46, %v65, 0.0
    %v74 = vsel %vm46, %v66, 0.0
    %v75 = vadd.f32 %v73, %v74
    %v76 = vsel %vm46, %v67, 0.0
    %v77 = vadd.f32 %v75, %v76
    %v78 = vsel %vm46, %v68, 0.0
    %v79 = vadd.f32 %v77, %v78
    %v80 = vsel %vm46, %v69, 0.0
    %v81 = vadd.f32 %v79, %v80
    %v82 = vsel %vm46, %v70, 0.0
    %v83 = vadd.f32 %v81, %v82
    %v84 = vsel %vm46, %v71, 0.0
    %v85 = vadd.f32 %v83, %v84
    %v86 = vsel %vm46, %v72, 0.0
    %v87 = vadd.f32 %v85, %v86
    %v88 = vadd.f32 %v64, %v87
    %89 = vst.msk [vmem:[#allocation3] sm:$0xf] %vm46, %v88
    // Predicated region
    $region14: #{tpu_custom_call.1} parent=1 // pred_check
      %p90 = pneg %p30
    $region15: #{tpu_custom_call.1} parent=1 // pred_check_branch
      %92 = sbr.rel (%p90) target = $region17
    $region16: #{tpu_custom_call.1} parent=1 // pred_region
      %v93 = vld [vmem:[#allocation2] sm:$0xf]
      %v94 = vsel %vm46, %v93, 0.0
      %95 = vadd.xlane.f32.xlu0 %v94
      %v96 = vpop.xlane.xlu0 %95
      %vm97 = vcmask 3072
      %98 = vst.msk [vmem:[%s1] sm:$0xf] %vm97, %v96
      %v99 = vld [vmem:[#allocation3] sm:$0xf]
      %v100 = vsel %vm46, %v99, 0.0
      %101 = vadd.xlane.f32.xlu0 %v100
      %v102 = vpop.xlane.xlu0 %101
      %103 = vst.msk [vmem:[%s2] sm:$0xf] %vm97, %v102
    $region17: #{tpu_custom_call.1} parent=1 // pred_fallthru
      _
    // Predicated region
    $region18: #{tpu_custom_call.1} parent=1 // pred_check
      _
    $region19: #{tpu_custom_call.1} parent=1 // pred_check_branch
      %105 = sbr.rel (0) target = $region21
    $region20: #{tpu_custom_call.1} parent=1 // pred_region
      _
    $region21: #{tpu_custom_call.1} parent=1 // pred_fallthru
      _
    // Predicated region
    $region22: #{tpu_custom_call.1} parent=1 // pred_check
      _
    $region23: #{tpu_custom_call.1} parent=1 // pred_check_branch
      %107 = sbr.rel (0) target = $region25
    $region24: #{tpu_custom_call.1} parent=1 // pred_region
      _
    $region25: #{tpu_custom_call.1} parent=1 // pred_fallthru
      _
    // Predicated region
    $region26: #{tpu_custom_call.1} parent=1 // pred_check
      _
    $region27: #{tpu_custom_call.1} parent=1 // pred_check_branch
      %109 = sbr.rel (0) target = $region29
    $region28: #{tpu_custom_call.1} parent=1 // pred_region
      _
    $region29: #{tpu_custom_call.1} parent=1 // pred_fallthru
      _
    // Predicated region
    $region30: #{tpu_custom_call.1} parent=1 // pred_check
      _
    $region31: #{tpu_custom_call.1} parent=1 // pred_check_branch
      %111 = sbr.rel (0) target = $region33
    $region32: #{tpu_custom_call.1} parent=1 // pred_region
      _
    $region33: #{tpu_custom_call.1} parent=1 // pred_fallthru
      _
    %112 = vsyncpa [#allocation5], 1

</llo_original>
